<compile_context>
chip_gen: v6e
topology: v6e:2x2x1
jax: 0.10.0
libtpu: 0.0.40
codegen_flags: <defaults>
</compile_context>

<pallas_src>
import functools

import jax
import jax.numpy as jnp
from jax.experimental import pallas as pl
from jax.experimental.pallas import tpu as pltpu


# ----------------------------------------------------------------------------
# Fused kernel: build graph operators on-chip -> conv1 -> relu -> conv2 -> relu
#               -> u_dot_v -> sigmoid
# ----------------------------------------------------------------------------

def gcn_forward_kernel(src_idx_ref, dst_idx_ref, feat_ref,
                       w1_ref, b1_ref, w2_ref, b2_ref, out_ref):
    n_pad = feat_ref.shape[0]
    e_pad = src_idx_ref.shape[1]

    # --- one-hot edge selectors, built on-chip from the int32 index rows -----
    node_iota = jax.lax.broadcasted_iota(jnp.int32, (n_pad, e_pad), 0)
    src_oh_f32 = (node_iota == src_idx_ref[...]).astype(jnp.float32)  # (N, E)
    dst_oh_f32 = (node_iota == dst_idx_ref[...]).astype(jnp.float32)  # (N, E)
    src_oh = src_oh_f32.astype(jnp.bfloat16)                          # exact 0/1
    dst_oh = dst_oh_f32.astype(jnp.bfloat16)

    # --- degrees (exact counts) + inverse sqrt, all in f32 -------------------
    out_deg = jnp.sum(src_oh_f32, axis=1, keepdims=True)              # (N, 1)
    in_deg = jnp.sum(dst_oh_f32, axis=1, keepdims=True)               # (N, 1)
    inv_sqrt_out = jax.lax.rsqrt(jnp.maximum(out_deg, 1.0))           # (N, 1)
    inv_sqrt_in = jax.lax.rsqrt(jnp.maximum(in_deg, 1.0))             # (N, 1)

    # --- dense adjacency adj[v, u] = #edges u -> v, built on the MXU ---------
    adj = jax.lax.dot_general(dst_oh, src_oh, (((1,), (1,)), ((), ())),
                              preferred_element_type=jnp.float32)     # (N, N)
    adj = adj.astype(jnp.bfloat16)    # small integer counts: exact in bf16

    # --- GraphConv (norm='both'): D_in^{-1/2} A D_out^{-1/2} X W + b ---------
    # Normalisation is applied feature-side so adj itself is never rescaled.
    def graph_conv(x, w_ref, b_ref):
        x = (x * inv_sqrt_out).astype(jnp.bfloat16)
        agg = jnp.dot(adj, x, preferred_element_type=jnp.float32)
        agg = (agg * inv_sqrt_in).astype(jnp.bfloat16)
        return jnp.dot(agg, w_ref[...].astype(jnp.bfloat16),
                       preferred_element_type=jnp.float32) + b_ref[...]

    h = jnp.maximum(graph_conv(feat_ref[...], w1_ref, b1_ref), 0.0)   # (N, H)
    h = jnp.maximum(graph_conv(h, w2_ref, b2_ref), 0.0)               # (N, Do)

    # --- DotProductPredictor: score_e = sigmoid(h[src_e] . h[dst_e]) ---------
    # Gathers contract h's node axis directly (no explicit transpose); the
    # result is already (Dout, E_pad) so the final reduction is over sublanes
    # and the store is a lane-dense (1, E_pad) row.
    h_bf16 = h.astype(jnp.bfloat16)
    hs = jax.lax.dot_general(h_bf16, src_oh, (((0,), (0,)), ((), ())),
                             preferred_element_type=jnp.float32)      # (Do, E)
    hd = jax.lax.dot_general(h_bf16, dst_oh, (((0,), (0,)), ((), ())),
                             preferred_element_type=jnp.float32)      # (Do, E)
    scores = jnp.sum(hs * hd, axis=0, keepdims=True)                  # (1, E)
    out_ref[...] = jax.nn.sigmoid(scores)


# ----------------------------------------------------------------------------
# pallas_call glue (no grid; whole problem resident in VMEM, single-buffered)
# ----------------------------------------------------------------------------

def _round_up(x, m):
    return ((x + m - 1) // m) * m


def gcn_model(features, src, dst, edge_type, params, *, num_nodes):
    """GCNModel.forward(g, features, edge_type) -> per-edge scores (E,)."""
    del edge_type  # GCNModel.forward accepts edge_type but never uses it.

    N = num_nodes
    E = src.shape[0]
    in_feats = features.shape[1]
    hidden = params["W1"].shape[1]
    out_feats = params["W2"].shape[1]

    n_pad = _round_up(max(N, 8), 8)            # sublane-friendly node count
    e_pad = _round_up(max(E, 128), 128)        # lane-dense edge-score row
    din_pad = _round_up(in_feats, 128)         # lane-dense feature dims
    dhid_pad = _round_up(hidden, 128)
    dout_pad = _round_up(out_feats, 128)

    # Zero-padded dense operands (tiny; built once per call).
    feat = jnp.zeros((n_pad, din_pad), jnp.float32).at[:N, :in_feats].set(
        features.astype(jnp.float32))
    w1 = jnp.zeros((din_pad, dhid_pad), jnp.float32).at[:in_feats, :hidden].set(
        params["W1"].astype(jnp.float32))
    b1 = jnp.zeros((1, dhid_pad), jnp.float32).at[:, :hidden].set(
        params["b1"].astype(jnp.float32))
    w2 = jnp.zeros((dhid_pad, dout_pad), jnp.float32).at[:hidden, :out_feats].set(
        params["W2"].astype(jnp.float32))
    b2 = jnp.zeros((1, dout_pad), jnp.float32).at[:, :out_feats].set(
        params["b2"].astype(jnp.float32))

    # Edge endpoints as small int32 rows; padded edges use -1 (never matches).
    src_idx = jnp.full((1, e_pad), -1, jnp.int32).at[0, :E].set(
        src.astype(jnp.int32))
    dst_idx = jnp.full((1, e_pad), -1, jnp.int32).at[0, :E].set(
        dst.astype(jnp.int32))

    args = (src_idx, dst_idx, feat, w1, b1, w2, b2)

    flops = (
        2 * n_pad * n_pad * e_pad                       # adj = dst_oh @ src_oh^T
        + 2 * n_pad * n_pad * (din_pad + dhid_pad)      # two aggregations
        + 2 * n_pad * din_pad * dhid_pad                # layer-1 weight matmul
        + 2 * n_pad * dhid_pad * dout_pad               # layer-2 weight matmul
        + 2 * 2 * n_pad * dout_pad * e_pad              # two edge gathers
    )
    bytes_accessed = (sum(a.size * a.dtype.itemsize for a in args)
                      + 4 * e_pad)
    cost = pl.CostEstimate(flops=flops,
                           transcendentals=e_pad + 2 * n_pad,
                           bytes_accessed=bytes_accessed)

    vmem_spec = pl.BlockSpec(memory_space=pltpu.MemorySpace.VMEM)
    out_row = pl.pallas_call(
        gcn_forward_kernel,
        in_specs=[vmem_spec] * len(args),
        out_specs=vmem_spec,
        out_shape=jax.ShapeDtypeStruct((1, e_pad), jnp.float32),
        cost_estimate=cost,
    )(*args)

    return out_row[0, :E]


# ----------------------------------------------------------------------------
# Deterministic parameter initialisation
# ----------------------------------------------------------------------------

def init_params(key, in_feats, hidden_size, out_feats):
    k = jax.random.split(key, 4)
    scale = 0.1
    return {
        # GraphConv weights stored (in, out) so the kernel computes x @ W,
        # matching DGL GraphConv's weight layout.
        "W1": scale * jax.random.normal(k[0], (in_feats, hidden_size), jnp.float32),
        "b1": scale * jax.random.normal(k[1], (1, hidden_size), jnp.float32),
        "W2": scale * jax.random.normal(k[2], (hidden_size, out_feats), jnp.float32),
        "b2": scale * jax.random.normal(k[3], (1, out_feats), jnp.float32),
    }


# ----------------------------------------------------------------------------
# Main
# ----------------------------------------------------------------------------

if __name__ == "__main__":
    key = jax.random.PRNGKey(0)
    k_feat, k_src, k_dst, k_et, k_par = jax.random.split(key, 5)

    num_nodes = 16
    num_edges = 48
    in_feats = 32
    hidden_size = 64
    out_feats = 32

    features = jax.random.normal(k_feat, (num_nodes, in_feats), jnp.float32)
    src = jax.random.randint(k_src, (num_edges,), 0, num_nodes)
    dst = jax.random.randint(k_dst, (num_edges,), 0, num_nodes)
    edge_type = jax.random.randint(k_et, (num_edges,), 0, 3)   # unused by GCNModel

    params = init_params(k_par, in_feats, hidden_size, out_feats)

    model = jax.jit(functools.partial(gcn_model, num_nodes=num_nodes))
    out = model(features, src, dst, edge_type, params)
    out = jax.block_until_ready(out)

    assert out.shape == (num_edges,)
    assert bool(jnp.all(jnp.isfinite(out)))
    assert bool(jnp.all((out > 0.0) & (out < 1.0)))
    print("KERNEL_OK")
</pallas_src>

<mosaic_0001>
module attributes {stable_mosaic.version = 11 : i64} {
  func.func @gcn_forward_kernel(%arg0: memref<1x128xi32, #tpu.memory_space<vmem>>, %arg1: memref<1x128xi32, #tpu.memory_space<vmem>>, %arg2: memref<16x128xf32, #tpu.memory_space<vmem>>, %arg3: memref<128x128xf32, #tpu.memory_space<vmem>>, %arg4: memref<1x128xf32, #tpu.memory_space<vmem>>, %arg5: memref<128x128xf32, #tpu.memory_space<vmem>>, %arg6: memref<1x128xf32, #tpu.memory_space<vmem>>, %arg7: memref<1x128xf32, #tpu.memory_space<vmem>>) attributes {dimension_semantics = [], scalar_prefetch = 0 : i64, scratch_operands = 0 : i64, tpu.core_type = #tpu.core_type<tc>} {
    %0 = tpu.iota {dimensions = array<i32: 0>} : vector<16x128xi32>
    %c0 = arith.constant 0 : index
    %c0_0 = arith.constant 0 : index
    %1 = vector.load %arg0[%c0, %c0_0] : memref<1x128xi32, #tpu.memory_space<vmem>>, vector<1x128xi32>
    %2 = vector.broadcast %1 : vector<1x128xi32> to vector<16x128xi32>
    %3 = arith.cmpi eq, %0, %2 : vector<16x128xi32>
    %4 = arith.extui %3 : vector<16x128xi1> to vector<16x128xi32>
    %5 = arith.sitofp %4 : vector<16x128xi32> to vector<16x128xf32>
    %c0_1 = arith.constant 0 : index
    %c0_2 = arith.constant 0 : index
    %6 = vector.load %arg1[%c0_1, %c0_2] : memref<1x128xi32, #tpu.memory_space<vmem>>, vector<1x128xi32>
    %7 = vector.broadcast %6 : vector<1x128xi32> to vector<16x128xi32>
    %8 = arith.cmpi eq, %0, %7 : vector<16x128xi32>
    %9 = arith.extui %8 : vector<16x128xi1> to vector<16x128xi32>
    %10 = arith.sitofp %9 : vector<16x128xi32> to vector<16x128xf32>
    %11 = arith.truncf %5 : vector<16x128xf32> to vector<16x128xbf16>
    %12 = arith.truncf %10 : vector<16x128xf32> to vector<16x128xbf16>
    %cst = arith.constant dense<0.000000e+00> : vector<16xf32>
    %13 = vector.multi_reduction <add>, %5, %cst [1] : vector<16x128xf32> to vector<16xf32>
    %14 = vector.shape_cast %13 : vector<16xf32> to vector<16x1xf32>
    %cst_3 = arith.constant dense<0.000000e+00> : vector<16xf32>
    %15 = vector.multi_reduction <add>, %10, %cst_3 [1] : vector<16x128xf32> to vector<16xf32>
    %16 = vector.shape_cast %15 : vector<16xf32> to vector<16x1xf32>
    %cst_4 = arith.constant 1.000000e+00 : f32
    %17 = vector.broadcast %cst_4 : f32 to vector<16x1xf32>
    %18 = arith.maximumf %14, %17 : vector<16x1xf32>
    %19 = math.rsqrt %18 : vector<16x1xf32>
    %cst_5 = arith.constant 1.000000e+00 : f32
    %20 = vector.broadcast %cst_5 : f32 to vector<16x1xf32>
    %21 = arith.maximumf %16, %20 : vector<16x1xf32>
    %22 = math.rsqrt %21 : vector<16x1xf32>
    %cst_6 = arith.constant dense<0.000000e+00> : vector<16x16xf32>
    %23 = tpu.matmul %12, %11, %cst_6 {dimension_numbers = #tpu.dot_dimension_numbers<[1], [1], [0], [0], [0, 0, 1, 0], [], []>} : vector<16x128xbf16>, vector<16x128xbf16>, vector<16x16xf32> -> vector<16x16xf32>
    %24 = arith.truncf %23 : vector<16x16xf32> to vector<16x16xbf16>
    %c0_7 = arith.constant 0 : index
    %c0_8 = arith.constant 0 : index
    %25 = vector.load %arg2[%c0_7, %c0_8] : memref<16x128xf32, #tpu.memory_space<vmem>>, vector<16x128xf32>
    %26 = vector.broadcast %19 : vector<16x1xf32> to vector<16x128xf32>
    %27 = arith.mulf %25, %26 : vector<16x128xf32>
    %28 = arith.truncf %27 : vector<16x128xf32> to vector<16x128xbf16>
    %cst_9 = arith.constant dense<0.000000e+00> : vector<16x128xf32>
    %29 = tpu.matmul %24, %28, %cst_9 {dimension_numbers = #tpu.dot_dimension_numbers<[1], [0], [0], [1], [0, 0, 1, 1], [], []>} : vector<16x16xbf16>, vector<16x128xbf16>, vector<16x128xf32> -> vector<16x128xf32>
    %30 = vector.broadcast %22 : vector<16x1xf32> to vector<16x128xf32>
    %31 = arith.mulf %29, %30 : vector<16x128xf32>
    %32 = arith.truncf %31 : vector<16x128xf32> to vector<16x128xbf16>
    %c0_10 = arith.constant 0 : index
    %c0_11 = arith.constant 0 : index
    %33 = vector.load %arg3[%c0_10, %c0_11] : memref<128x128xf32, #tpu.memory_space<vmem>>, vector<128x128xf32>
    %34 = arith.truncf %33 : vector<128x128xf32> to vector<128x128xbf16>
    %cst_12 = arith.constant dense<0.000000e+00> : vector<16x128xf32>
    %35 = tpu.matmul %32, %34, %cst_12 {dimension_numbers = #tpu.dot_dimension_numbers<[1], [0], [0], [1], [0, 0, 1, 1], [], []>} : vector<16x128xbf16>, vector<128x128xbf16>, vector<16x128xf32> -> vector<16x128xf32>
    %c0_13 = arith.constant 0 : index
    %c0_14 = arith.constant 0 : index
    %36 = vector.load %arg4[%c0_13, %c0_14] : memref<1x128xf32, #tpu.memory_space<vmem>>, vector<1x128xf32>
    %37 = vector.broadcast %36 : vector<1x128xf32> to vector<16x128xf32>
    %38 = arith.addf %35, %37 : vector<16x128xf32>
    %cst_15 = arith.constant 0.000000e+00 : f32
    %39 = vector.broadcast %cst_15 : f32 to vector<16x128xf32>
    %40 = arith.maximumf %38, %39 : vector<16x128xf32>
    %41 = vector.broadcast %19 : vector<16x1xf32> to vector<16x128xf32>
    %42 = arith.mulf %40, %41 : vector<16x128xf32>
    %43 = arith.truncf %42 : vector<16x128xf32> to vector<16x128xbf16>
    %cst_16 = arith.constant dense<0.000000e+00> : vector<16x128xf32>
    %44 = tpu.matmul %24, %43, %cst_16 {dimension_numbers = #tpu.dot_dimension_numbers<[1], [0], [0], [1], [0, 0, 1, 1], [], []>} : vector<16x16xbf16>, vector<16x128xbf16>, vector<16x128xf32> -> vector<16x128xf32>
    %45 = vector.broadcast %22 : vector<16x1xf32> to vector<16x128xf32>
    %46 = arith.mulf %44, %45 : vector<16x128xf32>
    %47 = arith.truncf %46 : vector<16x128xf32> to vector<16x128xbf16>
    %c0_17 = arith.constant 0 : index
    %c0_18 = arith.constant 0 : index
    %48 = vector.load %arg5[%c0_17, %c0_18] : memref<128x128xf32, #tpu.memory_space<vmem>>, vector<128x128xf32>
    %49 = arith.truncf %48 : vector<128x128xf32> to vector<128x128xbf16>
    %cst_19 = arith.constant dense<0.000000e+00> : vector<16x128xf32>
    %50 = tpu.matmul %47, %49, %cst_19 {dimension_numbers = #tpu.dot_dimension_numbers<[1], [0], [0], [1], [0, 0, 1, 1], [], []>} : vector<16x128xbf16>, vector<128x128xbf16>, vector<16x128xf32> -> vector<16x128xf32>
    %c0_20 = arith.constant 0 : index
    %c0_21 = arith.constant 0 : index
    %51 = vector.load %arg6[%c0_20, %c0_21] : memref<1x128xf32, #tpu.memory_space<vmem>>, vector<1x128xf32>
    %52 = vector.broadcast %51 : vector<1x128xf32> to vector<16x128xf32>
    %53 = arith.addf %50, %52 : vector<16x128xf32>
    %cst_22 = arith.constant 0.000000e+00 : f32
    %54 = vector.broadcast %cst_22 : f32 to vector<16x128xf32>
    %55 = arith.maximumf %53, %54 : vector<16x128xf32>
    %56 = arith.truncf %55 : vector<16x128xf32> to vector<16x128xbf16>
    %cst_23 = arith.constant dense<0.000000e+00> : vector<128x128xf32>
    %57 = tpu.matmul %56, %11, %cst_23 {dimension_numbers = #tpu.dot_dimension_numbers<[0], [0], [1], [1], [0, 1, 1, 1], [], []>} : vector<16x128xbf16>, vector<16x128xbf16>, vector<128x128xf32> -> vector<128x128xf32>
    %cst_24 = arith.constant dense<0.000000e+00> : vector<128x128xf32>
    %58 = tpu.matmul %56, %12, %cst_24 {dimension_numbers = #tpu.dot_dimension_numbers<[0], [0], [1], [1], [0, 1, 1, 1], [], []>} : vector<16x128xbf16>, vector<16x128xbf16>, vector<128x128xf32> -> vector<128x128xf32>
    %59 = arith.mulf %57, %58 : vector<128x128xf32>
    %cst_25 = arith.constant dense<0.000000e+00> : vector<128xf32>
    %60 = vector.multi_reduction <add>, %59, %cst_25 [0] : vector<128x128xf32> to vector<128xf32>
    %61 = vector.shape_cast %60 : vector<128xf32> to vector<1x128xf32>
    %62 = arith.negf %61 : vector<1x128xf32>
    %63 = math.exp %62 : vector<1x128xf32>
    %cst_26 = arith.constant 1.000000e+00 : f32
    %64 = vector.broadcast %cst_26 : f32 to vector<1x128xf32>
    %65 = arith.addf %64, %63 : vector<1x128xf32>
    %66 = arith.divf %64, %65 : vector<1x128xf32>
    %c0_27 = arith.constant 0 : index
    %c0_28 = arith.constant 0 : index
    %67 = vector.load %arg7[%c0_27, %c0_28] : memref<1x128xf32, #tpu.memory_space<vmem>>, vector<1x128xf32>
    tpu.vector_store %arg7[%c0_27, %c0_28], %66 {strides = array<i32>} : memref<1x128xf32, #tpu.memory_space<vmem>>, vector<1x128xf32>,
    return
  }
}

</mosaic_0001>

<llo_original>
// kernel: gcn_model.1
$region0: #{gcn_model.1}
  #allocation0 [shape = 'u32[]', space=smem, size = 0x4, offset = 0x4, fixed_abs, tag = 'smem constant byte address 0x4 - core index']
  #allocation1 [shape = 'u32[144,128]{1,0:T(1,128)}', space=vmem, size = 0x12000, scoped, tag = 'internal scratch']
  %s0 = inlined_call_operand.vmem [shape: s32[1,128], index: 0, kind: input, shape index: {}]
  %s1 = inlined_call_operand.vmem [shape: s32[1,128], index: 1, kind: input, shape index: {}]
  %s2 = inlined_call_operand.vmem [shape: f32[16,128], index: 2, kind: input, shape index: {}]
  %s3 = inlined_call_operand.vmem [shape: f32[128,128], index: 3, kind: input, shape index: {}]
  %s4 = inlined_call_operand.vmem [shape: f32[1,128], index: 4, kind: input, shape index: {}]
  %s5 = inlined_call_operand.vmem [shape: f32[128,128], index: 5, kind: input, shape index: {}]
  %s6 = inlined_call_operand.vmem [shape: f32[1,128], index: 6, kind: input, shape index: {}]
  %s7 = inlined_call_operand.vmem [shape: f32[1,128], index: 7, kind: output, shape index: {}]
  %s8 = sld [smem:[#allocation0]]
  $region38: #{gcn_model.1} parent=0
    _
  %s10 = ssub.s32 1, %s8
  %s11 = scalar_select 0, %s10, %s8
  // Predicated region
  $region2: #{gcn_model.1} parent=0 // pred_check
    _
  $region3: #{gcn_model.1} parent=0 // pred_check_branch
    %13 = sbr.rel (0) target = $region5
  $region4: #{gcn_model.1} parent=0 // pred_region
    _
  $region5: #{gcn_model.1} parent=0 // pred_fallthru
    _
  // Predicated region
  $region6: #{gcn_model.1} parent=0 // pred_check
    _
  $region7: #{gcn_model.1} parent=0 // pred_check_branch
    %15 = sbr.rel (0) target = $region9
  $region8: #{gcn_model.1} parent=0 // pred_region
    _
  $region9: #{gcn_model.1} parent=0 // pred_fallthru
    _
  // Predicated region
  $region10: #{gcn_model.1} parent=0 // pred_check
    _
  $region11: #{gcn_model.1} parent=0 // pred_check_branch
    %17 = sbr.rel (0) target = $region13
  $region12: #{gcn_model.1} parent=0 // pred_region
    _
  $region13: #{gcn_model.1} parent=0 // pred_fallthru
    _
  // Predicated region
  $region14: #{gcn_model.1} parent=0 // pred_check
    _
  $region15: #{gcn_model.1} parent=0 // pred_check_branch
    %19 = sbr.rel (0) target = $region17
  $region16: #{gcn_model.1} parent=0 // pred_region
    _
  $region17: #{gcn_model.1} parent=0 // pred_fallthru
    _
  // Predicated region
  $region18: #{gcn_model.1} parent=0 // pred_check
    _
  $region19: #{gcn_model.1} parent=0 // pred_check_branch
    %21 = sbr.rel (0) target = $region21
  $region20: #{gcn_model.1} parent=0 // pred_region
    _
  $region21: #{gcn_model.1} parent=0 // pred_fallthru
    _
  // Predicated region
  $region22: #{gcn_model.1} parent=0 // pred_check
    _
  $region23: #{gcn_model.1} parent=0 // pred_check_branch
    %23 = sbr.rel (0) target = $region25
  $region24: #{gcn_model.1} parent=0 // pred_region
    _
  $region25: #{gcn_model.1} parent=0 // pred_fallthru
    _
  // Predicated region
  $region26: #{gcn_model.1} parent=0 // pred_check
    _
  $region27: #{gcn_model.1} parent=0 // pred_check_branch
    %25 = sbr.rel (0) target = $region29
  $region28: #{gcn_model.1} parent=0 // pred_region
    _
  $region29: #{gcn_model.1} parent=0 // pred_fallthru
    _
  %v27 = vlaneseq
  %v28 = vshrl.u32 %v27, 7
  %v29 = vadd.s32 %v28, 8
  %v30 = vld [vmem:[%s0] sm:$0x1]
  %v31 = vlaneseq
  %v32 = vshrl.u32 %v31, 7
  %v33 = vsub.s32 0, %v32
  %v34 = vrot.slane %v30, %v33
  %vm35 = vcmp.eq.s32.totalorder %v28, %v34
  %vm36 = vcmp.eq.s32.totalorder %v29, %v34
  %v37 = vsel %vm35, 1, 0
  %v38 = vsel %vm36, 1, 0
  %v39 = vcvt.s32.f32 %v37
  %v40 = vcvt.s32.f32 %v38
  %v41 = vld [vmem:[%s1] sm:$0x1]
  %v42 = vlaneseq
  %v43 = vshrl.u32 %v42, 7
  %v44 = vsub.s32 0, %v43
  %v45 = vrot.slane %v41, %v44
  %vm46 = vcmp.eq.s32.totalorder %v28, %v45
  %vm47 = vcmp.eq.s32.totalorder %v29, %v45
  %v48 = vsel %vm46, 1, 0
  %v49 = vsel %vm47, 1, 0
  %v50 = vcvt.s32.f32 %v48
  %v51 = vcvt.s32.f32 %v49
  %v52 = vpack.c.bf16 %v40, %v39
  %v53 = vpack.c.bf16 %v51, %v50
  %54 = vadd.xlane.f32.xlu0 %v39
  %v55 = vpop.xlane.xlu0 %54
  %56 = vadd.xlane.f32.xlu0 %v40
  %v57 = vpop.xlane.xlu0 %56
  %58 = vadd.xlane.f32.xlu0 %v50
  %v59 = vpop.xlane.xlu0 %58
  %60 = vadd.xlane.f32.xlu0 %v51
  %v61 = vpop.xlane.xlu0 %60
  %v62 = vmax.f32 %v55, 1.0
  %v63 = vmax.f32 %v57, 1.0
  %v64 = vrsqrt.pop %v62
  %v65 = vrsqrt.pop %v63
  %v66 = vmax.f32 %v59, 1.0
  %v67 = vmax.f32 %v61, 1.0
  %v68 = vrsqrt.pop %v66
  %v69 = vrsqrt.pop %v67
  %70 = vmatprep.subr.bf16.mxu0 0
  %71 = vmatpush1.bf16.xpose.msra.mxu0 0
  %72 = vmatprep.subr.bf16.mxu0 0
  %73 = vmatpush1.bf16.xpose.msra.mxu0 0
  %74 = vmatprep.subr.bf16.mxu0 0
  %75 = vmatpush1.bf16.xpose.msra.mxu0 0
  %76 = vmatprep.subr.bf16.mxu0 0
  %77 = vmatpush1.bf16.xpose.msra.mxu0 0
  %78 = vmatprep.subr.bf16.mxu0 0
  %79 = vmatpush1.bf16.xpose.msra.mxu0 0
  %80 = vmatprep.subr.bf16.mxu0 0
  %81 = vmatpush1.bf16.xpose.msra.mxu0 0
  %82 = vmatprep.subr.bf16.mxu0 0
  %83 = vmatpush1.bf16.xpose.msra.mxu0 0
  %84 = vmatprep.subr.bf16.mxu0 0
  %85 = vmatpush1.bf16.xpose.msra.mxu0 %v52
  %86 = vmatprep.subr.bf16.mxu0 0
  %87 = vmatpush2.bf16.xpose.msra.mxu0 0
  %88 = vmatprep.subr.bf16.mxu0 0
  %89 = vmatpush2.bf16.xpose.msra.mxu0 0
  %90 = vmatprep.subr.bf16.mxu0 0
  %91 = vmatpush2.bf16.xpose.msra.mxu0 0
  %92 = vmatprep.subr.bf16.mxu0 0
  %93 = vmatpush2.bf16.xpose.msra.mxu0 0
  %94 = vmatprep.subr.bf16.mxu0 0
  %95 = vmatpush2.bf16.xpose.msra.mxu0 0
  %96 = vmatprep.subr.bf16.mxu0 0
  %97 = vmatpush2.bf16.xpose.msra.mxu0 0
  %98 = vmatprep.subr.bf16.mxu0 0
  %99 = vmatpush2.bf16.xpose.msra.mxu0 0
  %100 = vmatprep.subr.bf16.mxu0 0
  %101 = vmatpush2.bf16.xpose.msra.mxu0 0
  %102 = vmatprep.mubr.bf16.mxu0 0
  %103 = vmatmul.mubr.bf16.gmra.mxu0 %v53
  %v104 = vpop.f32.mrf.mxu0
  %v105 = vadd.f32 0.0, %v104
  %v106 = vpop.f32.mrf.mxu0
  %v107 = vpop.f32.mrf.mxu0
  %v108 = vadd.f32 0.0, %v107
  %v109 = vpop.f32.mrf.mxu0
  %110 = vdwg.mxu0
  %v111 = vpack.c.bf16 %v108, %v105
  %v112 = vld [vmem:[%s2] sm:$0xff]
  %v113 = vld [vmem:[%s2 + $0x8] sm:$0xff]
  %v114 = vmul.f32 %v112, %v64
  %v115 = vmul.f32 %v113, %v65
  %v116 = vpack.c.bf16 %v115, %v114
  %vm117 = vcmask 130048
  %v119 = vsel %vm117, %v111, 0
  %121 = vmatprep.subr.bf16.mxu0 0
  %122 = vmatpush1.bf16.msra.mxu0 0
  %123 = vmatprep.subr.bf16.mxu0 0
  %124 = vmatpush1.bf16.msra.mxu0 0
  %125 = vmatprep.subr.bf16.mxu0 0
  %126 = vmatpush1.bf16.msra.mxu0 0
  %127 = vmatprep.subr.bf16.mxu0 0
  %128 = vmatpush1.bf16.msra.mxu0 0
  %129 = vmatprep.subr.bf16.mxu0 0
  %130 = vmatpush1.bf16.msra.mxu0 0
  %131 = vmatprep.subr.bf16.mxu0 0
  %132 = vmatpush1.bf16.msra.mxu0 0
  %133 = vmatprep.subr.bf16.mxu0 0
  %134 = vmatpush1.bf16.msra.mxu0 0
  %135 = vmatprep.subr.bf16.mxu0 0
  %136 = vmatpush1.bf16.msra.mxu0 %v116
  %137 = vmatprep.subr.bf16.mxu0 0
  %138 = vmatpush2.bf16.msra.mxu0 0
  %139 = vmatprep.subr.bf16.mxu0 0
  %140 = vmatpush2.bf16.msra.mxu0 0
  %141 = vmatprep.subr.bf16.mxu0 0
  %142 = vmatpush2.bf16.msra.mxu0 0
  %143 = vmatprep.subr.bf16.mxu0 0
  %144 = vmatpush2.bf16.msra.mxu0 0
  %145 = vmatprep.subr.bf16.mxu0 0
  %146 = vmatpush2.bf16.msra.mxu0 0
  %147 = vmatprep.subr.bf16.mxu0 0
  %148 = vmatpush2.bf16.msra.mxu0 0
  %149 = vmatprep.subr.bf16.mxu0 0
  %150 = vmatpush2.bf16.msra.mxu0 0
  %151 = vmatprep.subr.bf16.mxu0 0
  %152 = vmatpush2.bf16.msra.mxu0 0
  %153 = vmatprep.mubr.bf16.mxu0 0
  %154 = vmatmul.mubr.bf16.gmra.mxu0 %v119
  %v155 = vpop.f32.mrf.mxu0
  %v156 = vadd.f32 0.0, %v155
  %v157 = vpop.f32.mrf.mxu0
  %v158 = vpop.f32.mrf.mxu0
  %v159 = vadd.f32 0.0, %v158
  %v160 = vpop.f32.mrf.mxu0
  %161 = vdwg.mxu0
  %v162 = vmul.f32 %v156, %v68
  %v163 = vmul.f32 %v159, %v69
  %v164 = vpack.c.bf16 %v163, %v162
  %v165 = vld [vmem:[%s3] sm:$0xff]
  %v166 = vld [vmem:[%s3 + $0x8] sm:$0xff]
  %v167 = vld [vmem:[%s3 + $0x10] sm:$0xff]
  %v168 = vld [vmem:[%s3 + $0x18] sm:$0xff]
  %v169 = vld [vmem:[%s3 + $0x20] sm:$0xff]
  %v170 = vld [vmem:[%s3 + $0x28] sm:$0xff]
  %v171 = vld [vmem:[%s3 + $0x30] sm:$0xff]
  %v172 = vld [vmem:[%s3 + $0x38] sm:$0xff]
  %v173 = vld [vmem:[%s3 + $0x40] sm:$0xff]
  %v174 = vld [vmem:[%s3 + $0x48] sm:$0xff]
  %v175 = vld [vmem:[%s3 + $0x50] sm:$0xff]
  %v176 = vld [vmem:[%s3 + $0x58] sm:$0xff]
  %v177 = vld [vmem:[%s3 + $0x60] sm:$0xff]
  %v178 = vld [vmem:[%s3 + $0x68] sm:$0xff]
  %v179 = vld [vmem:[%s3 + $0x70] sm:$0xff]
  %v180 = vld [vmem:[%s3 + $0x78] sm:$0xff]
  %v181 = vpack.c.bf16 %v166, %v165
  %v182 = vpack.c.bf16 %v168, %v167
  %v183 = vpack.c.bf16 %v170, %v169
  %v184 = vpack.c.bf16 %v172, %v171
  %v185 = vpack.c.bf16 %v174, %v173
  %v186 = vpack.c.bf16 %v176, %v175
  %v187 = vpack.c.bf16 %v178, %v177
  %v188 = vpack.c.bf16 %v180, %v179
  %v189 = vld [vmem:[%s4] sm:$0x1]
  %v191 = vlaneseq
  %v192 = vshrl.u32 %v191, 7
  %v193 = vsub.s32 0, %v192
  %v194 = vrot.slane %v189, %v193
  %196 = vmatprep.subr.bf16.mxu0 0
  %197 = vmatpush1.bf16.msra.mxu0 %v188
  %198 = vmatprep.subr.bf16.mxu0 0
  %199 = vmatpush1.bf16.msra.mxu0 %v187
  %200 = vmatprep.subr.bf16.mxu0 0
  %201 = vmatpush1.bf16.msra.mxu0 %v186
  %202 = vmatprep.subr.bf16.mxu0 0
  %203 = vmatpush1.bf16.msra.mxu0 %v185
  %204 = vmatprep.subr.bf16.mxu0 0
  %205 = vmatpush1.bf16.msra.mxu0 %v184
  %206 = vmatprep.subr.bf16.mxu0 0
  %207 = vmatpush1.bf16.msra.mxu0 %v183
  %208 = vmatprep.subr.bf16.mxu0 0
  %209 = vmatpush1.bf16.msra.mxu0 %v182
  %210 = vmatprep.subr.bf16.mxu0 0
  %211 = vmatpush1.bf16.msra.mxu0 %v181
  %212 = vmatprep.subr.bf16.mxu0 0
  %213 = vmatpush2.bf16.msra.mxu0 0
  %214 = vmatprep.subr.bf16.mxu0 0
  %215 = vmatpush2.bf16.msra.mxu0 0
  %216 = vmatprep.subr.bf16.mxu0 0
  %217 = vmatpush2.bf16.msra.mxu0 0
  %218 = vmatprep.subr.bf16.mxu0 0
  %219 = vmatpush2.bf16.msra.mxu0 0
  %220 = vmatprep.subr.bf16.mxu0 0
  %221 = vmatpush2.bf16.msra.mxu0 0
  %222 = vmatprep.subr.bf16.mxu0 0
  %223 = vmatpush2.bf16.msra.mxu0 0
  %224 = vmatprep.subr.bf16.mxu0 0
  %225 = vmatpush2.bf16.msra.mxu0 0
  %226 = vmatprep.subr.bf16.mxu0 0
  %227 = vmatpush2.bf16.msra.mxu0 0
  %228 = vmatprep.mubr.bf16.mxu0 0
  %229 = vmatmul.mubr.bf16.gmra.mxu0 %v164
  %v230 = vpop.f32.mrf.mxu0
  %v231 = vadd.f32 %v194, %v230
  %v232 = vpop.f32.mrf.mxu0
  %v233 = vpop.f32.mrf.mxu0
  %v234 = vadd.f32 %v194, %v233
  %v235 = vpop.f32.mrf.mxu0
  %236 = vdwg.mxu0
  %v237 = vmax.f32 %v231, 0.0
  %v238 = vmax.f32 %v234, 0.0
  %v239 = vmul.f32 %v237, %v64
  %v240 = vmul.f32 %v238, %v65
  %v241 = vpack.c.bf16 %v240, %v239
  %242 = vmatprep.subr.bf16.mxu0 0
  %243 = vmatpush1.bf16.msra.mxu0 0
  %244 = vmatprep.subr.bf16.mxu0 0
  %245 = vmatpush1.bf16.msra.mxu0 0
  %246 = vmatprep.subr.bf16.mxu0 0
  %247 = vmatpush1.bf16.msra.mxu0 0
  %248 = vmatprep.subr.bf16.mxu0 0
  %249 = vmatpush1.bf16.msra.mxu0 0
  %250 = vmatprep.subr.bf16.mxu0 0
  %251 = vmatpush1.bf16.msra.mxu0 0
  %252 = vmatprep.subr.bf16.mxu0 0
  %253 = vmatpush1.bf16.msra.mxu0 0
  %254 = vmatprep.subr.bf16.mxu0 0
  %255 = vmatpush1.bf16.msra.mxu0 0
  %256 = vmatprep.subr.bf16.mxu0 0
  %257 = vmatpush1.bf16.msra.mxu0 %v241
  %258 = vmatprep.subr.bf16.mxu0 0
  %259 = vmatpush2.bf16.msra.mxu0 0
  %260 = vmatprep.subr.bf16.mxu0 0
  %261 = vmatpush2.bf16.msra.mxu0 0
  %262 = vmatprep.subr.bf16.mxu0 0
  %263 = vmatpush2.bf16.msra.mxu0 0
  %264 = vmatprep.subr.bf16.mxu0 0
  %265 = vmatpush2.bf16.msra.mxu0 0
  %266 = vmatprep.subr.bf16.mxu0 0
  %267 = vmatpush2.bf16.msra.mxu0 0
  %268 = vmatprep.subr.bf16.mxu0 0
  %269 = vmatpush2.bf16.msra.mxu0 0
  %270 = vmatprep.subr.bf16.mxu0 0
  %271 = vmatpush2.bf16.msra.mxu0 0
  %272 = vmatprep.subr.bf16.mxu0 0
  %273 = vmatpush2.bf16.msra.mxu0 0
  %274 = vmatprep.mubr.bf16.mxu0 0
  %275 = vmatmul.mubr.bf16.gmra.mxu0 %v119
  %v276 = vpop.f32.mrf.mxu0
  %v277 = vadd.f32 0.0, %v276
  %v278 = vpop.f32.mrf.mxu0
  %v279 = vpop.f32.mrf.mxu0
  %v280 = vadd.f32 0.0, %v279
  %v281 = vpop.f32.mrf.mxu0
  %282 = vdwg.mxu0
  %v283 = vmul.f32 %v277, %v68
  %v284 = vmul.f32 %v280, %v69
  %v285 = vpack.c.bf16 %v284, %v283
  %v286 = vld [vmem:[%s5] sm:$0xff]
  %v287 = vld [vmem:[%s5 + $0x8] sm:$0xff]
  %v288 = vld [vmem:[%s5 + $0x10] sm:$0xff]
  %v289 = vld [vmem:[%s5 + $0x18] sm:$0xff]
  %v290 = vld [vmem:[%s5 + $0x20] sm:$0xff]
  %v291 = vld [vmem:[%s5 + $0x28] sm:$0xff]
  %v292 = vld [vmem:[%s5 + $0x30] sm:$0xff]
  %v293 = vld [vmem:[%s5 + $0x38] sm:$0xff]
  %v294 = vld [vmem:[%s5 + $0x40] sm:$0xff]
  %v295 = vld [vmem:[%s5 + $0x48] sm:$0xff]
  %v296 = vld [vmem:[%s5 + $0x50] sm:$0xff]
  %v297 = vld [vmem:[%s5 + $0x58] sm:$0xff]
  %v298 = vld [vmem:[%s5 + $0x60] sm:$0xff]
  %v299 = vld [vmem:[%s5 + $0x68] sm:$0xff]
  %v300 = vld [vmem:[%s5 + $0x70] sm:$0xff]
  %v301 = vld [vmem:[%s5 + $0x78] sm:$0xff]
  %v302 = vpack.c.bf16 %v287, %v286
  %v303 = vpack.c.bf16 %v289, %v288
  %v304 = vpack.c.bf16 %v291, %v290
  %v305 = vpack.c.bf16 %v293, %v292
  %v306 = vpack.c.bf16 %v295, %v294
  %v307 = vpack.c.bf16 %v297, %v296
  %v308 = vpack.c.bf16 %v299, %v298
  %v309 = vpack.c.bf16 %v301, %v300
  %v310 = vld [vmem:[%s6] sm:$0x1]
  %v312 = vlaneseq
  %v313 = vshrl.u32 %v312, 7
  %v314 = vsub.s32 0, %v313
  %v315 = vrot.slane %v310, %v314
  %317 = vmatprep.subr.bf16.mxu0 0
  %318 = vmatpush1.bf16.msra.mxu0 %v309
  %319 = vmatprep.subr.bf16.mxu0 0
  %320 = vmatpush1.bf16.msra.mxu0 %v308
  %321 = vmatprep.subr.bf16.mxu0 0
  %322 = vmatpush1.bf16.msra.mxu0 %v307
  %323 = vmatprep.subr.bf16.mxu0 0
  %324 = vmatpush1.bf16.msra.mxu0 %v306
  %325 = vmatprep.subr.bf16.mxu0 0
  %326 = vmatpush1.bf16.msra.mxu0 %v305
  %327 = vmatprep.subr.bf16.mxu0 0
  %328 = vmatpush1.bf16.msra.mxu0 %v304
  %329 = vmatprep.subr.bf16.mxu0 0
  %330 = vmatpush1.bf16.msra.mxu0 %v303
  %331 = vmatprep.subr.bf16.mxu0 0
  %332 = vmatpush1.bf16.msra.mxu0 %v302
  %333 = vmatprep.subr.bf16.mxu0 0
  %334 = vmatpush2.bf16.msra.mxu0 0
  %335 = vmatprep.subr.bf16.mxu0 0
  %336 = vmatpush2.bf16.msra.mxu0 0
  %337 = vmatprep.subr.bf16.mxu0 0
  %338 = vmatpush2.bf16.msra.mxu0 0
  %339 = vmatprep.subr.bf16.mxu0 0
  %340 = vmatpush2.bf16.msra.mxu0 0
  %341 = vmatprep.subr.bf16.mxu0 0
  %342 = vmatpush2.bf16.msra.mxu0 0
  %343 = vmatprep.subr.bf16.mxu0 0
  %344 = vmatpush2.bf16.msra.mxu0 0
  %345 = vmatprep.subr.bf16.mxu0 0
  %346 = vmatpush2.bf16.msra.mxu0 0
  %347 = vmatprep.subr.bf16.mxu0 0
  %348 = vmatpush2.bf16.msra.mxu0 0
  %349 = vmatprep.mubr.bf16.mxu0 0
  %350 = vmatmul.mubr.bf16.gmra.mxu0 %v285
  %v351 = vpop.f32.mrf.mxu0
  %v352 = vadd.f32 %v315, %v351
  %v353 = vpop.f32.mrf.mxu0
  %v354 = vpop.f32.mrf.mxu0
  %v355 = vadd.f32 %v315, %v354
  %v356 = vpop.f32.mrf.mxu0
  %357 = vdwg.mxu0
  %v358 = vmax.f32 %v352, 0.0
  %v359 = vmax.f32 %v355, 0.0
  %v360 = vpack.c.bf16 %v359, %v358
  %361 = vxpose.xlu0.c.b16.start [1/8] %v360, 128
  %362 = vxpose.xlu0.c.b16.cont [2/8] 0, 128
  %363 = vxpose.xlu0.c.b16.cont [3/8] 0, 128
  %364 = vxpose.xlu0.c.b16.cont [4/8] 0, 128
  %365 = vxpose.xlu0.c.b16.cont [5/8] 0, 128
  %366 = vxpose.xlu0.c.b16.cont [6/8] 0, 128
  %367 = vxpose.xlu0.c.b16.cont [7/8] 0, 128
  %368 = vxpose.xlu0.c.b16.end [8/8] 0, 128
  %v369 = vpop.trf.xlu0
  %v370 = vpop.trf.xlu0
  %v371 = vpop.trf.xlu0
  %v372 = vpop.trf.xlu0
  %v373 = vpop.trf.xlu0
  %v374 = vpop.trf.xlu0
  %v375 = vpop.trf.xlu0
  %v376 = vpop.trf.xlu0
  %v378 = vsel %vm117, %v369, 0
  %v381 = vsel %vm117, %v370, 0
  %v384 = vsel %vm117, %v371, 0
  %v387 = vsel %vm117, %v372, 0
  %v390 = vsel %vm117, %v373, 0
  %v393 = vsel %vm117, %v374, 0
  %v396 = vsel %vm117, %v375, 0
  %v399 = vsel %vm117, %v376, 0
  %401 = vmatprep.subr.bf16.mxu0 0
  %402 = vmatpush1.bf16.msra.mxu0 0
  %403 = vmatprep.subr.bf16.mxu0 0
  %404 = vmatpush1.bf16.msra.mxu0 0
  %405 = vmatprep.subr.bf16.mxu0 0
  %406 = vmatpush1.bf16.msra.mxu0 0
  %407 = vmatprep.subr.bf16.mxu0 0
  %408 = vmatpush1.bf16.msra.mxu0 0
  %409 = vmatprep.subr.bf16.mxu0 0
  %410 = vmatpush1.bf16.msra.mxu0 0
  %411 = vmatprep.subr.bf16.mxu0 0
  %412 = vmatpush1.bf16.msra.mxu0 0
  %413 = vmatprep.subr.bf16.mxu0 0
  %414 = vmatpush1.bf16.msra.mxu0 0
  %415 = vmatprep.subr.bf16.mxu0 0
  %416 = vmatpush1.bf16.msra.mxu0 %v52
  %417 = vmatprep.subr.bf16.mxu0 0
  %418 = vmatpush2.bf16.msra.mxu0 0
  %419 = vmatprep.subr.bf16.mxu0 0
  %420 = vmatpush2.bf16.msra.mxu0 0
  %421 = vmatprep.subr.bf16.mxu0 0
  %422 = vmatpush2.bf16.msra.mxu0 0
  %423 = vmatprep.subr.bf16.mxu0 0
  %424 = vmatpush2.bf16.msra.mxu0 0
  %425 = vmatprep.subr.bf16.mxu0 0
  %426 = vmatpush2.bf16.msra.mxu0 0
  %427 = vmatprep.subr.bf16.mxu0 0
  %428 = vmatpush2.bf16.msra.mxu0 0
  %429 = vmatprep.subr.bf16.mxu0 0
  %430 = vmatpush2.bf16.msra.mxu0 0
  %431 = vmatprep.subr.bf16.mxu0 0
  %432 = vmatpush2.bf16.msra.mxu0 0
  %433 = vmatprep.mubr.bf16.mxu0 0
  %434 = vmatmul.mubr.bf16.gmra.mxu0 %v378
  %v435 = vpop.f32.mrf.mxu0
  %v436 = vadd.f32 0.0, %v435
  %v437 = vpop.f32.mrf.mxu0
  %v438 = vpop.f32.mrf.mxu0
  %v439 = vadd.f32 0.0, %v438
  %v440 = vpop.f32.mrf.mxu0
  %441 = vmatprep.mubr.bf16.mxu0 0
  %442 = vmatmul.mubr.bf16.gmra.mxu0 %v381
  %v443 = vpop.f32.mrf.mxu0
  %v444 = vadd.f32 0.0, %v443
  %v445 = vpop.f32.mrf.mxu0
  %v446 = vpop.f32.mrf.mxu0
  %v447 = vadd.f32 0.0, %v446
  %v448 = vpop.f32.mrf.mxu0
  %449 = vmatprep.mubr.bf16.mxu0 0
  %450 = vmatmul.mubr.bf16.gmra.mxu0 %v384
  %v451 = vpop.f32.mrf.mxu0
  %v452 = vadd.f32 0.0, %v451
  %v453 = vpop.f32.mrf.mxu0
  %v454 = vpop.f32.mrf.mxu0
  %v455 = vadd.f32 0.0, %v454
  %v456 = vpop.f32.mrf.mxu0
  %457 = vmatprep.mubr.bf16.mxu0 0
  %458 = vmatmul.mubr.bf16.gmra.mxu0 %v387
  %v459 = vpop.f32.mrf.mxu0
  %v460 = vadd.f32 0.0, %v459
  %v461 = vpop.f32.mrf.mxu0
  %v462 = vpop.f32.mrf.mxu0
  %v463 = vadd.f32 0.0, %v462
  %v464 = vpop.f32.mrf.mxu0
  %465 = vmatprep.mubr.bf16.mxu0 0
  %466 = vmatmul.mubr.bf16.gmra.mxu0 %v390
  %v467 = vpop.f32.mrf.mxu0
  %v468 = vadd.f32 0.0, %v467
  %v469 = vpop.f32.mrf.mxu0
  %v470 = vpop.f32.mrf.mxu0
  %v471 = vadd.f32 0.0, %v470
  %v472 = vpop.f32.mrf.mxu0
  %473 = vmatprep.mubr.bf16.mxu0 0
  %474 = vmatmul.mubr.bf16.gmra.mxu0 %v393
  %v475 = vpop.f32.mrf.mxu0
  %v476 = vadd.f32 0.0, %v475
  %v477 = vpop.f32.mrf.mxu0
  %v478 = vpop.f32.mrf.mxu0
  %v479 = vadd.f32 0.0, %v478
  %v480 = vpop.f32.mrf.mxu0
  %481 = vmatprep.mubr.bf16.mxu0 0
  %482 = vmatmul.mubr.bf16.gmra.mxu0 %v396
  %v483 = vpop.f32.mrf.mxu0
  %v484 = vadd.f32 0.0, %v483
  %v485 = vpop.f32.mrf.mxu0
  %v486 = vpop.f32.mrf.mxu0
  %v487 = vadd.f32 0.0, %v486
  %v488 = vpop.f32.mrf.mxu0
  %489 = vmatprep.mubr.bf16.mxu0 0
  %490 = vmatmul.mubr.bf16.gmra.mxu0 %v399
  %v491 = vpop.f32.mrf.mxu0
  %v492 = vadd.f32 0.0, %v491
  %v493 = vpop.f32.mrf.mxu0
  %v494 = vpop.f32.mrf.mxu0
  %v495 = vadd.f32 0.0, %v494
  %v496 = vpop.f32.mrf.mxu0
  %497 = vdwg.mxu0
  %498 = vmatprep.subr.bf16.mxu0 0
  %499 = vmatpush1.bf16.msra.mxu0 0
  %500 = vmatprep.subr.bf16.mxu0 0
  %501 = vmatpush1.bf16.msra.mxu0 0
  %502 = vmatprep.subr.bf16.mxu0 0
  %503 = vmatpush1.bf16.msra.mxu0 0
  %504 = vmatprep.subr.bf16.mxu0 0
  %505 = vmatpush1.bf16.msra.mxu0 0
  %506 = vmatprep.subr.bf16.mxu0 0
  %507 = vmatpush1.bf16.msra.mxu0 0
  %508 = vmatprep.subr.bf16.mxu0 0
  %509 = vmatpush1.bf16.msra.mxu0 0
  %510 = vmatprep.subr.bf16.mxu0 0
  %511 = vmatpush1.bf16.msra.mxu0 0
  %512 = vmatprep.subr.bf16.mxu0 0
  %513 = vmatpush1.bf16.msra.mxu0 %v53
  %514 = vmatprep.subr.bf16.mxu0 0
  %515 = vmatpush2.bf16.msra.mxu0 0
  %516 = vmatprep.subr.bf16.mxu0 0
  %517 = vmatpush2.bf16.msra.mxu0 0
  %518 = vmatprep.subr.bf16.mxu0 0
  %519 = vmatpush2.bf16.msra.mxu0 0
  %520 = vmatprep.subr.bf16.mxu0 0
  %521 = vmatpush2.bf16.msra.mxu0 0
  %522 = vmatprep.subr.bf16.mxu0 0
  %523 = vmatpush2.bf16.msra.mxu0 0
  %524 = vmatprep.subr.bf16.mxu0 0
  %525 = vmatpush2.bf16.msra.mxu0 0
  %526 = vmatprep.subr.bf16.mxu0 0
  %527 = vmatpush2.bf16.msra.mxu0 0
  %528 = vmatprep.subr.bf16.mxu0 0
  %529 = vmatpush2.bf16.msra.mxu0 0
  %530 = vmatprep.mubr.bf16.mxu0 0
  %531 = vmatmul.mubr.bf16.gmra.mxu0 %v378
  %v532 = vpop.f32.mrf.mxu0
  %v533 = vadd.f32 0.0, %v532
  %v534 = vpop.f32.mrf.mxu0
  %v535 = vpop.f32.mrf.mxu0
  %v536 = vadd.f32 0.0, %v535
  %v537 = vpop.f32.mrf.mxu0
  %538 = vmatprep.mubr.bf16.mxu0 0
  %539 = vmatmul.mubr.bf16.gmra.mxu0 %v381
  %v540 = vpop.f32.mrf.mxu0
  %v541 = vadd.f32 0.0, %v540
  %v542 = vpop.f32.mrf.mxu0
  %v543 = vpop.f32.mrf.mxu0
  %v544 = vadd.f32 0.0, %v543
  %v545 = vpop.f32.mrf.mxu0
  %546 = vmatprep.mubr.bf16.mxu0 0
  %547 = vmatmul.mubr.bf16.gmra.mxu0 %v384
  %v548 = vpop.f32.mrf.mxu0
  %v549 = vadd.f32 0.0, %v548
  %v550 = vpop.f32.mrf.mxu0
  %v551 = vpop.f32.mrf.mxu0
  %v552 = vadd.f32 0.0, %v551
  %v553 = vpop.f32.mrf.mxu0
  %554 = vmatprep.mubr.bf16.mxu0 0
  %555 = vmatmul.mubr.bf16.gmra.mxu0 %v387
  %v556 = vpop.f32.mrf.mxu0
  %v557 = vadd.f32 0.0, %v556
  %v558 = vpop.f32.mrf.mxu0
  %v559 = vpop.f32.mrf.mxu0
  %v560 = vadd.f32 0.0, %v559
  %v561 = vpop.f32.mrf.mxu0
  %562 = vmatprep.mubr.bf16.mxu0 0
  %563 = vmatmul.mubr.bf16.gmra.mxu0 %v390
  %v564 = vpop.f32.mrf.mxu0
  %v565 = vadd.f32 0.0, %v564
  %v566 = vpop.f32.mrf.mxu0
  %v567 = vpop.f32.mrf.mxu0
  %v568 = vadd.f32 0.0, %v567
  %v569 = vpop.f32.mrf.mxu0
  %570 = vmatprep.mubr.bf16.mxu0 0
  %571 = vmatmul.mubr.bf16.gmra.mxu0 %v393
  %v572 = vpop.f32.mrf.mxu0
  %v573 = vadd.f32 0.0, %v572
  %v574 = vpop.f32.mrf.mxu0
  %v575 = vpop.f32.mrf.mxu0
  %v576 = vadd.f32 0.0, %v575
  %v577 = vpop.f32.mrf.mxu0
  %578 = vmatprep.mubr.bf16.mxu0 0
  %579 = vmatmul.mubr.bf16.gmra.mxu0 %v396
  %v580 = vpop.f32.mrf.mxu0
  %v581 = vadd.f32 0.0, %v580
  %v582 = vpop.f32.mrf.mxu0
  %v583 = vpop.f32.mrf.mxu0
  %v584 = vadd.f32 0.0, %v583
  %v585 = vpop.f32.mrf.mxu0
  %586 = vmatprep.mubr.bf16.mxu0 0
  %587 = vmatmul.mubr.bf16.gmra.mxu0 %v399
  %v588 = vpop.f32.mrf.mxu0
  %v589 = vadd.f32 0.0, %v588
  %v590 = vpop.f32.mrf.mxu0
  %v591 = vpop.f32.mrf.mxu0
  %v592 = vadd.f32 0.0, %v591
  %v593 = vpop.f32.mrf.mxu0
  %594 = vdwg.mxu0
  %v595 = vmul.f32 %v436, %v533
  %v596 = vmul.f32 %v439, %v536
  %v597 = vmul.f32 %v444, %v541
  %v598 = vmul.f32 %v447, %v544
  %v599 = vmul.f32 %v452, %v549
  %v600 = vmul.f32 %v455, %v552
  %v601 = vmul.f32 %v460, %v557
  %v602 = vmul.f32 %v463, %v560
  %v603 = vmul.f32 %v468, %v565
  %v604 = vmul.f32 %v471, %v568
  %v605 = vmul.f32 %v476, %v573
  %v606 = vmul.f32 %v479, %v576
  %v607 = vmul.f32 %v484, %v581
  %v608 = vmul.f32 %v487, %v584
  %v609 = vmul.f32 %v492, %v589
  %v610 = vmul.f32 %v495, %v592
  %v611 = vadd.f32 %v595, %v596
  %v612 = vadd.f32 %v611, %v597
  %v613 = vadd.f32 %v612, %v598
  %v614 = vadd.f32 %v613, %v599
  %v615 = vadd.f32 %v614, %v600
  %v616 = vadd.f32 %v615, %v601
  %v617 = vadd.f32 %v616, %v602
  %v618 = vadd.f32 %v617, %v603
  %v619 = vadd.f32 %v618, %v604
  %v620 = vadd.f32 %v619, %v605
  %v621 = vadd.f32 %v620, %v606
  %v622 = vadd.f32 %v621, %v607
  %v623 = vadd.f32 %v622, %v608
  %v624 = vadd.f32 %v623, %v609
  %v625 = vadd.f32 %v624, %v610
  %v626 = vrot.slane %v625, 4
  %v627 = vadd.f32 %v625, %v626
  %v628 = vrot.slane %v627, 2
  %v629 = vadd.f32 %v627, %v628
  %v630 = vrot.slane %v629, 1
  %v631 = vadd.f32 %v629, %v630
  %v632 = vxor.u32 %v631, 2147483648
  %v633 = vmul.f32 %v632, 1.442695
  %v634 = vpow.pop %v633
  %v635 = vadd.f32 %v634, 1.0
  %v636 = vrcp.pop %v635
  %v637 = vmul.f32 1.0, %v636
  %638 = vst [vmem:[%s7] sm:$0x1] %v637
  // Predicated region
  $region30: #{gcn_model.1} parent=0 // pred_check
    _
  $region31: #{gcn_model.1} parent=0 // pred_check_branch
    %640 = sbr.rel (0) target = $region33
  $region32: #{gcn_model.1} parent=0 // pred_region
    _
  $region33: #{gcn_model.1} parent=0 // pred_fallthru
    _
  // Predicated region
  $region34: #{gcn_model.1} parent=0 // pred_check
    _
  $region35: #{gcn_model.1} parent=0 // pred_check_branch
    %642 = sbr.rel (0) target = $region37
  $region36: #{gcn_model.1} parent=0 // pred_region
    _
  $region37: #{gcn_model.1} parent=0 // pred_fallthru
    _

</llo_original>
